<compile_context>
chip_gen: v7x
topology: tpu7x:2x2x1
jax: 0.10.0
libtpu: 0.0.40
codegen_flags: <defaults>
</compile_context>

<pallas_src>
import functools

import jax
import jax.numpy as jnp
from jax.experimental import pallas as pl
from jax.experimental.pallas import tpu as pltpu


# ---------------------------------------------------------------------------
# Hardware-aware knobs
# ---------------------------------------------------------------------------
@functools.lru_cache(maxsize=1)
def _hw_params():
    """(target_block_bytes, vmem_limit_bytes) — generation-aware with safe defaults."""
    target = 2 * 1024 * 1024          # conservative default (fits v5e scoped VMEM)
    vmem_limit = 32 * 1024 * 1024
    try:
        info = pltpu.get_tpu_info()
        cap = int(info.vmem_capacity_bytes)
        # 4 MiB blocks: pipeline footprint ~2*(img+out)+noise ~ 16-17 MiB,
        # well inside v7x's 64 MiB VMEM and amortizes per-step overhead on
        # fast-HBM chips; never size the scoped limit past half of physical.
        target = 4 * 1024 * 1024
        vmem_limit = min(64 * 1024 * 1024, max(32 * 1024 * 1024, cap // 2))
    except Exception:
        pass                          # non-TPU / interpret backend: keep defaults
    return target, vmem_limit


# ---------------------------------------------------------------------------
# Tile selection
# ---------------------------------------------------------------------------
def _round_down(x, m):
    return (x // m) * m


def _choose_tiles(C, HW, itemsize, target_bytes):
    # Lane axis: multiple of 128 up to 2048; full HW when HW < 128 (block ==
    # full dim is legal). Ragged last tile is handled by the cdiv grid.
    if HW < 128:
        hw_t = HW
    else:
        hw_t = min(2048, _round_down(HW, 128))
    # Sublane axis: multiple of 8 (f32) / 16 (packed dtypes), capped so one
    # image block is ~target_bytes; full C when C is below the alignment.
    sub_align = 8 if itemsize >= 4 else 16
    if C <= sub_align:
        c_t = C
    else:
        max_c = max(sub_align, target_bytes // max(1, hw_t * itemsize))
        c_t = max(sub_align, min(_round_down(C, sub_align), _round_down(max_c, sub_align)))
        c_t = min(c_t, C)
    return c_t, hw_t


# ---------------------------------------------------------------------------
# Kernel
# ---------------------------------------------------------------------------
def _noise_add_kernel(w_ref, img_ref, noise_ref, out_ref):
    # w_ref: SMEM (1,1) f32 ; img_ref: VMEM (1,c_t,hw_t) ; noise_ref: VMEM (1,1,hw_t)
    w = w_ref[0, 0]
    wn = w * noise_ref[...].astype(jnp.float32)                  # one mul per HW elem
    out_ref[...] = (img_ref[...] + wn).astype(out_ref.dtype)     # broadcast over C


# ---------------------------------------------------------------------------
# pallas_call wrappers
# ---------------------------------------------------------------------------
@functools.partial(jax.jit, static_argnames=("c_t", "hw_t", "vmem_limit"))
def _noise_injection_tiled(w2d, image_flat, noise_flat, *, c_t, hw_t, vmem_limit):
    B, C, HW = image_flat.shape
    n_hw = pl.cdiv(HW, hw_t)
    n_c = pl.cdiv(C, c_t)

    # Largest-extent parallel axis leads (v7x megacore split even at batch 1);
    # channel-tile axis innermost so the noise DMA is reused across it.
    if n_hw >= B:
        grid = (n_hw, B, n_c)
        img_map = lambda hw, b, c: (b, c, hw)
        noise_map = lambda hw, b, c: (b, 0, hw)
    else:
        grid = (B, n_hw, n_c)
        img_map = lambda b, hw, c: (b, c, hw)
        noise_map = lambda b, hw, c: (b, 0, hw)

    return pl.pallas_call(
        _noise_add_kernel,
        out_shape=jax.ShapeDtypeStruct((B, C, HW), image_flat.dtype),
        grid_spec=pltpu.PrefetchScalarGridSpec(
            num_scalar_prefetch=0,
            grid=grid,
            in_specs=[
                pl.BlockSpec(memory_space=pltpu.MemorySpace.SMEM),   # weight (f32)
                pl.BlockSpec((1, c_t, hw_t), img_map),               # image
                pl.BlockSpec((1, 1, hw_t), noise_map),               # noise (DMA reused over c)
            ],
            out_specs=pl.BlockSpec((1, c_t, hw_t), img_map),
        ),
        compiler_params=pltpu.CompilerParams(
            dimension_semantics=("parallel", "parallel", "arbitrary"),
            vmem_limit_bytes=vmem_limit,
        ),
    )(w2d, image_flat, noise_flat)


@functools.partial(jax.jit, static_argnames=("vmem_limit",))
def _noise_injection_full(w2d, image_flat, noise_flat, *, vmem_limit):
    # Small-feature-map fast path: one full (C, HW) block per batch element.
    B, C, HW = image_flat.shape
    return pl.pallas_call(
        _noise_add_kernel,
        out_shape=jax.ShapeDtypeStruct((B, C, HW), image_flat.dtype),
        grid_spec=pltpu.PrefetchScalarGridSpec(
            num_scalar_prefetch=0,
            grid=(B,),
            in_specs=[
                pl.BlockSpec(memory_space=pltpu.MemorySpace.SMEM),   # weight (f32)
                pl.BlockSpec((1, C, HW), lambda b: (b, 0, 0)),       # image (full per batch)
                pl.BlockSpec((1, 1, HW), lambda b: (b, 0, 0)),       # noise
            ],
            out_specs=pl.BlockSpec((1, C, HW), lambda b: (b, 0, 0)),
        ),
        compiler_params=pltpu.CompilerParams(
            dimension_semantics=("parallel",),
            vmem_limit_bytes=vmem_limit,
        ),
    )(w2d, image_flat, noise_flat)


# ---------------------------------------------------------------------------
# Module forward
# ---------------------------------------------------------------------------
def _adaptive_avg_pool2d(noise, out_h, out_w):
    """Plain-JAX glue matching F.adaptive_avg_pool2d for evenly-divisible sizes."""
    B, C, H, W = noise.shape
    if H % out_h == 0 and W % out_w == 0:
        kh, kw = H // out_h, W // out_w
        return noise.reshape(B, C, out_h, kh, out_w, kw).mean(axis=(3, 5))
    # TODO(synk): general (non-divisible) adaptive_avg_pool2d window logic not implemented.
    raise NotImplementedError("adaptive_avg_pool2d with non-divisible sizes")


def noise_injection(image, noise=None, weight=None, *, key=None, tiles=None):
    """Forward pass of NoiseInjection.

    image:  (B, C, H, W)
    noise:  (B, 1, H', W') or None (generated ~ N(0,1) with jax.random if None)
    weight: scalar parameter (shape (1,)); defaults to zeros like the module.
    tiles:  optional (C_T, HW_T) override (forces the tiled path; for testing).
    """
    B, C, H, W = image.shape
    HW = H * W
    if weight is None:
        weight = jnp.zeros((1,), dtype=jnp.float32)          # module __init__: torch.zeros(1)
    w2d = jnp.asarray(weight, dtype=jnp.float32).reshape(1, 1)

    target_bytes, vmem_limit = _hw_params()
    itemsize = jnp.dtype(image.dtype).itemsize

    if noise is None:
        if key is None:
            key = jax.random.PRNGKey(0)
        ndtype = image.dtype if jnp.issubdtype(image.dtype, jnp.floating) else jnp.float32
        noise = jax.random.normal(key, (B, 1, H, W), dtype=ndtype)
    else:
        _, _, H1, W1 = noise.shape
        if (H1, W1) != (H, W):
            noise = _adaptive_avg_pool2d(noise, H, W)

    image_flat = image.reshape(B, C, HW)
    noise_flat = noise.reshape(B, 1, HW)

    if tiles is not None:
        c_t, hw_t = tiles
        out_flat = _noise_injection_tiled(w2d, image_flat, noise_flat,
                                          c_t=int(c_t), hw_t=int(hw_t),
                                          vmem_limit=vmem_limit)
    elif C * HW * itemsize <= target_bytes:
        out_flat = _noise_injection_full(w2d, image_flat, noise_flat,
                                         vmem_limit=vmem_limit)
    else:
        c_t, hw_t = _choose_tiles(C, HW, itemsize, target_bytes)
        out_flat = _noise_injection_tiled(w2d, image_flat, noise_flat,
                                          c_t=c_t, hw_t=hw_t,
                                          vmem_limit=vmem_limit)
    return out_flat.reshape(B, C, H, W)


# ---------------------------------------------------------------------------
# Self-test
# ---------------------------------------------------------------------------
if __name__ == "__main__":
    key = jax.random.PRNGKey(0)
    k_img, k_noise, k_img2, k_img3, k_gen = jax.random.split(key, 5)

    # Small canonical shape implied by the module -> exercises the full-block
    # fast path (grid=(B,)).
    B, C, H, W = 2, 4, 16, 16
    image = jax.random.normal(k_img, (B, C, H, W), dtype=jnp.float32)
    noise = jax.random.normal(k_noise, (B, 1, H, W), dtype=jnp.float32)

    w_zero = jnp.zeros((1,), dtype=jnp.float32)
    w_test = jnp.array([0.5], dtype=jnp.float32)

    out_zero = jax.block_until_ready(noise_injection(image, noise, w_zero))
    out_test = jax.block_until_ready(noise_injection(image, noise, w_test))
    assert jnp.allclose(out_zero, image + w_zero[0] * noise, atol=1e-6)
    assert jnp.allclose(out_test, image + w_test[0] * noise, atol=1e-6)

    # Larger shape forcing the multi-step tiled grid: exercises HW tiling,
    # channel-innermost iteration and the deduplicated noise DMA.
    B2, C2, H2, W2 = 1, 32, 64, 64
    image2 = jax.random.normal(k_img2, (B2, C2, H2, W2), dtype=jnp.float32)
    noise2 = jax.random.normal(k_noise, (B2, 1, H2, W2), dtype=jnp.float32)
    out2 = jax.block_until_ready(
        noise_injection(image2, noise2, w_test, tiles=(8, 1024)))
    assert jnp.allclose(out2, image2 + w_test[0] * noise2, atol=1e-6)

    # Ragged tiles: HW = 36*36 = 1296 (not a multiple of the 256-lane tile) and
    # C = 12 (ragged last channel tile) -> masked last blocks on both axes.
    B3, C3, H3, W3 = 1, 12, 36, 36
    image3 = jax.random.normal(k_img3, (B3, C3, H3, W3), dtype=jnp.float32)
    noise3 = jax.random.normal(k_noise, (B3, 1, H3, W3), dtype=jnp.float32)
    out3 = jax.block_until_ready(
        noise_injection(image3, noise3, w_test, tiles=(8, 256)))
    assert jnp.allclose(out3, image3 + w_test[0] * noise3, atol=1e-6)

    # Auto tile selection (no override) on the larger shape.
    out_auto = jax.block_until_ready(noise_injection(image2, noise2, w_test))
    assert jnp.allclose(out_auto, image2 + w_test[0] * noise2, atol=1e-6)

    # noise=None path: weight=0 must return the image exactly; with nonzero
    # weight the implied noise must be identical across channels and ~N(0,1).
    out_gen0 = jax.block_until_ready(noise_injection(image2, None, w_zero, key=k_gen))
    assert jnp.allclose(out_gen0, image2)
    out_gen = jax.block_until_ready(noise_injection(image2, None, w_test, key=k_gen))
    noise_est = (out_gen - image2) / w_test[0]
    assert jnp.isfinite(noise_est).all()
    assert jnp.allclose(noise_est, noise_est[:, :1], atol=1e-4)   # broadcast over C
    assert abs(float(noise_est[:, 0].mean())) < 0.15
    assert 0.85 < float(noise_est[:, 0].std()) < 1.15
    assert out_gen.shape == image2.shape

    print("KERNEL_OK")
</pallas_src>

<mosaic_0001>
module attributes {stable_mosaic.version = 11 : i64} {
  func.func @_noise_add_kernel(%arg0: i32, %arg1: memref<1x1xf32, #tpu.memory_space<smem>>, %arg2: memref<1x4x256xf32, #tpu.memory_space<vmem>>, %arg3: memref<1x1x256xf32, #tpu.memory_space<vmem>>, %arg4: memref<1x4x256xf32, #tpu.memory_space<vmem>>) attributes {dimension_semantics = [#tpu.dimension_semantics<parallel>], iteration_bounds = array<i64: 2>, scalar_prefetch = 0 : i64, scratch_operands = 0 : i64, tpu.core_type = #tpu.core_type<tc>, window_params = [{transform_indices = @transform_0, window_bounds = array<i64: 1, 1>}, {transform_indices = @transform_1, window_bounds = array<i64: 1, 4, 256>}, {transform_indices = @transform_2, window_bounds = array<i64: 1, 1, 256>}, {transform_indices = @transform_3, window_bounds = array<i64: 1, 4, 256>}]} {
    %c0 = arith.constant 0 : index
    %c0_0 = arith.constant 0 : index
    %0 = memref.load %arg1[%c0, %c0_0] : memref<1x1xf32, #tpu.memory_space<smem>>
    %c0_1 = arith.constant 0 : index
    %c0_2 = arith.constant 0 : index
    %c0_3 = arith.constant 0 : index
    %1 = vector.load %arg3[%c0_1, %c0_2, %c0_3] : memref<1x1x256xf32, #tpu.memory_space<vmem>>, vector<1x1x256xf32>
    %2 = vector.broadcast %0 : f32 to vector<1x1x256xf32>
    %3 = arith.mulf %2, %1 : vector<1x1x256xf32>
    %c0_4 = arith.constant 0 : index
    %c0_5 = arith.constant 0 : index
    %c0_6 = arith.constant 0 : index
    %4 = vector.load %arg2[%c0_4, %c0_5, %c0_6] : memref<1x4x256xf32, #tpu.memory_space<vmem>>, vector<1x4x256xf32>
    %5 = vector.broadcast %3 : vector<1x1x256xf32> to vector<1x4x256xf32>
    %6 = arith.addf %4, %5 : vector<1x4x256xf32>
    %c0_7 = arith.constant 0 : index
    %c0_8 = arith.constant 0 : index
    %c0_9 = arith.constant 0 : index
    %7 = vector.load %arg4[%c0_7, %c0_8, %c0_9] : memref<1x4x256xf32, #tpu.memory_space<vmem>>, vector<1x4x256xf32>
    tpu.vector_store %arg4[%c0_7, %c0_8, %c0_9], %6 {strides = array<i32>} : memref<1x4x256xf32, #tpu.memory_space<vmem>>, vector<1x4x256xf32>,
    return
  }
  func.func @transform_0(%arg0: i32) -> (i32, i32) {
    %c0_i32 = arith.constant 0 : i32
    %c0_i32_0 = arith.constant 0 : i32
    %c0_i32_1 = arith.constant 0 : i32
    return %c0_i32, %c0_i32_0 : i32, i32
  }
  func.func @transform_1(%arg0: i32) -> (i32, i32, i32) {
    %c0_i32 = arith.constant 0 : i32
    %c0_i32_0 = arith.constant 0 : i32
    %c0_i32_1 = arith.constant 0 : i32
    return %arg0, %c0_i32, %c0_i32_0 : i32, i32, i32
  }
  func.func @transform_2(%arg0: i32) -> (i32, i32, i32) {
    %c0_i32 = arith.constant 0 : i32
    %c0_i32_0 = arith.constant 0 : i32
    %c0_i32_1 = arith.constant 0 : i32
    return %arg0, %c0_i32, %c0_i32_0 : i32, i32, i32
  }
  func.func @transform_3(%arg0: i32) -> (i32, i32, i32) {
    %c0_i32 = arith.constant 0 : i32
    %c0_i32_0 = arith.constant 0 : i32
    %c0_i32_1 = arith.constant 0 : i32
    return %arg0, %c0_i32, %c0_i32_0 : i32, i32, i32
  }
}

</mosaic_0001>

<llo_original>
// kernel: _noise_injection_full.1
$region0: #{_noise_injection_full.1}
  #allocation0 [shape = 'u32[]', space=smem, size = 0x4, offset = 0x4, fixed_abs, tag = 'smem constant byte address 0x4 - core index']
  #allocation1 [shape = 'u32[144,128]{1,0:T(1,128)}', space=vmem, size = 0x12000, scoped, tag = 'internal scratch']
  #allocation2 [shape = 'f32[1,1]{1,0:T(1,128)S(6)}', space=smem, size = 0x200, scoped, tag = 'scoped memory for _noise_injection_full.1']
  %s0 = inlined_call_operand.<no memory space> [shape: f32[1,1], index: 0, kind: input, shape index: {}]
  %s1 = inlined_call_operand.hbm [shape: f32[2,4,256], index: 1, kind: input, shape index: {}]
  %s2 = inlined_call_operand.vmem [shape: f32[2,1,256], index: 2, kind: input, shape index: {}]
  %s3 = inlined_call_operand.hbm [shape: f32[2,4,256], index: 3, kind: output, shape index: {}]
  %s4 = sld [smem:[#allocation0]]
  $region49: #{_noise_injection_full.1} parent=0
    _
  %s6 = ssub.s32 1, %s4
  %s7 = scalar_select 0, %s6, %s4
  %8 = sst [smem:[#allocation2]] %s0
  $region1: #{_noise_injection_full.1} parent=0
    #allocation3 [shape = 'u8[8192]{0}', space=vmem, size = 0x2000, scoped, tag = 'input window, operand 1']
    #allocation4 [shape = 's32[2]{0}', space=sflag, size = 0x8, scoped, tag = 'scoped memory for _noise_injection_full.1']
    #allocation5 [shape = 's32[2]{0}', space=sflag, size = 0x8, scoped, tag = 'scoped memory for _noise_injection_full.1']
    #allocation6 [shape = 'u8[8192]{0}', space=vmem, size = 0x2000, scoped, tag = 'output window, operand 0']
    %9 = vsyncpa [#allocation4], 0
    %s10 = scalar_lea.sflag [#allocation4], 1
    %11 = vsyncpa %s10, 0
    %12 = vsyncpa [#allocation5], 0
    %s13 = scalar_lea.sflag [#allocation5], 1
    %14 = vsyncpa %s13, 0
    loop: start=0, step=1, limit=4
    $region2: #{_noise_injection_full.1} parent=1 // loop_pre_header
      _
    $region3: #{_noise_injection_full.1} parent=1 // loop_header
      %s16 = sphi 0, %s20
      %p17 = scmp.ge.s32.totalorder %s16, 4
      %s24 = sphi 0, %s24
      %s26 = sphi 0, %s24
      %s27 = sphi 0, %s26
      %s41 = sphi 0, %s27
      %s47 = sphi 0, %s49
      %s50 = sphi 0, %s47
      %s51 = sphi 0, %s50
      %s67 = sphi 0, %s51
      %s73 = sphi 0, %s75
      %s76 = sphi 0, %s73
      %s77 = sphi 0, %s76
      %s93 = sphi 0, %s77
      %s99 = sphi 0, %s101
      %s102 = sphi 0, %s99
      %s103 = sphi 0, %s102
      %s119 = sphi 0, %s103
    $region4: #{_noise_injection_full.1} parent=1 // loop_header_branch
      %19 = sbr.rel (%p17) target = $region8
    $region5: #{_noise_injection_full.1} parent=1 // loop_body
      %s21 = ssub.s32 %s16, 1
      %s22 = ssub.s32 %s16, 2
      %s23 = sadd.s32 %s16, 1
      %s25 = sadd.s32 %s24, 1
      %p28 = scmp.eq.s32.totalorder %s16, 1
      %p29 = scmp.ne.s32.totalorder %s24, %s26
      %p30 = scmp.eq.s32.totalorder %s16, 0
      %p31 = por %p29, %p30
      %p32 = scmp.ne.s32.totalorder %s24, %s26
      %p33 = scmp.eq.s32.totalorder %s21, 1
      %p34 = por %p32, %p33
      %p35 = scmp.ne.s32.totalorder %s26, %s27
      %p36 = scmp.eq.s32.totalorder %s21, 0
      %p37 = por %p35, %p36
      %p38 = scmp.ne.s32.totalorder %s26, %s27
      %p39 = scmp.eq.s32.totalorder %s22, 1
      %p40 = por %p38, %p39
      %p42 = scmp.ne.s32.totalorder %s27, %s41
      %p43 = scmp.eq.s32.totalorder %s22, 0
      %p44 = por %p42, %p43
      %s45 = ssub.s32 %s16, %s23
      %p46 = scmp.eq.s32.totalorder %s45, 0
      %s48 = sadd.s32 %s47, 1
      %s49 = scalar_select %p46, %s47, %s48
      %p52 = pneg %p46
      %p53 = scmp.eq.s32.totalorder %s16, 1
      %p54 = por %p52, %p53
      %p55 = scmp.ne.s32.totalorder %s47, %s50
      %p56 = scmp.eq.s32.totalorder %s16, 0
      %p57 = por %p55, %p56
      %p58 = scmp.ne.s32.totalorder %s47, %s50
      %p59 = scmp.eq.s32.totalorder %s21, 1
      %p60 = por %p58, %p59
      %p61 = scmp.ne.s32.totalorder %s50, %s51
      %p62 = scmp.eq.s32.totalorder %s21, 0
      %p63 = por %p61, %p62
      %p64 = scmp.ne.s32.totalorder %s50, %s51
      %p65 = scmp.eq.s32.totalorder %s22, 1
      %p66 = por %p64, %p65
      %p68 = scmp.ne.s32.totalorder %s51, %s67
      %p69 = scmp.eq.s32.totalorder %s22, 0
      %p70 = por %p68, %p69
      %s71 = ssub.s32 %s16, %s23
      %p72 = scmp.eq.s32.totalorder %s71, 0
      %s74 = sadd.s32 %s73, 1
      %s75 = scalar_select %p72, %s73, %s74
      %p78 = pneg %p72
      %p79 = scmp.eq.s32.totalorder %s16, 1
      %p80 = por %p78, %p79
      %p81 = scmp.ne.s32.totalorder %s73, %s76
      %p82 = scmp.eq.s32.totalorder %s16, 0
      %p83 = por %p81, %p82
      %p84 = scmp.ne.s32.totalorder %s73, %s76
      %p85 = scmp.eq.s32.totalorder %s21, 1
      %p86 = por %p84, %p85
      %p87 = scmp.ne.s32.totalorder %s76, %s77
      %p88 = scmp.eq.s32.totalorder %s21, 0
      %p89 = por %p87, %p88
      %p90 = scmp.ne.s32.totalorder %s76, %s77
      %p91 = scmp.eq.s32.totalorder %s22, 1
      %p92 = por %p90, %p91
      %p94 = scmp.ne.s32.totalorder %s77, %s93
      %p95 = scmp.eq.s32.totalorder %s22, 0
      %p96 = por %p94, %p95
      %s97 = ssub.s32 %s16, %s23
      %p98 = scmp.eq.s32.totalorder %s97, 0
      %s100 = sadd.s32 %s99, 1
      %s101 = scalar_select %p98, %s99, %s100
      %p104 = pneg %p98
      %p105 = scmp.eq.s32.totalorder %s16, 1
      %p106 = por %p104, %p105
      %p107 = scmp.ne.s32.totalorder %s99, %s102
      %p108 = scmp.eq.s32.totalorder %s16, 0
      %p109 = por %p107, %p108
      %p110 = scmp.ne.s32.totalorder %s99, %s102
      %p111 = scmp.eq.s32.totalorder %s21, 1
      %p112 = por %p110, %p111
      %p113 = scmp.ne.s32.totalorder %s102, %s103
      %p114 = scmp.eq.s32.totalorder %s21, 0
      %p115 = por %p113, %p114
      %p116 = scmp.ne.s32.totalorder %s102, %s103
      %p117 = scmp.eq.s32.totalorder %s22, 1
      %p118 = por %p116, %p117
      %p120 = scmp.ne.s32.totalorder %s103, %s119
      %p121 = scmp.eq.s32.totalorder %s22, 0
      %p122 = por %p120, %p121
      %p123 = scmp.le.s32.totalorder 1, %s16
      %p124 = scmp.lt.s32.totalorder %s16, 3
      %p125 = pnand %p123, %p124
      %p126 = pneg %p125
      // Predicated region
      $region9: #{_noise_injection_full.1} parent=5 // pred_check
        _
      $region10: #{_noise_injection_full.1} parent=5 // pred_check_branch
        %128 = sbr.rel (%p125) target = $region12
      $region11: #{_noise_injection_full.1} parent=5 // pred_region
        %s129 = ssub.s32 %s16, 1
        // Predicated region
        $region13: #{_noise_injection_full.1} parent=11 // pred_check
          %p130 = pneg %p37
        $region14: #{_noise_injection_full.1} parent=11 // pred_check_branch
          %132 = sbr.rel (%p130) target = $region16
        $region15: #{_noise_injection_full.1} parent=11 // pred_region
          _
        $region16: #{_noise_injection_full.1} parent=11 // pred_fallthru
          _
      $region12: #{_noise_injection_full.1} parent=5 // pred_fallthru
        _
      %p133 = scmp.lt.s32.totalorder %s16, 2
      // Predicated region
      $region17: #{_noise_injection_full.1} parent=5 // pred_check
        %p134 = pneg %p133
      $region18: #{_noise_injection_full.1} parent=5 // pred_check_branch
        %136 = sbr.rel (%p134) target = $region20
      $region19: #{_noise_injection_full.1} parent=5 // pred_region
        // Predicated region
        $region21: #{_noise_injection_full.1} parent=19 // pred_check
          %p137 = pneg %p57
        $region22: #{_noise_injection_full.1} parent=19 // pred_check_branch
          %139 = sbr.rel (%p137) target = $region24
        $region23: #{_noise_injection_full.1} parent=19 // pred_region
          %s140 = sand.u32 %s47, 1
          %s141 = scalar_lea.sflag [#allocation4], %s140
          %s142 = sand.u32 %s47, 1
          %s143 = smul.addr %s142, 8
          %s144 = scalar_lea.vmem [#allocation3], %s143
          %s146 = ssub.s32 128, 128
          %147 = vsyncadd %s141, %s146
          %s148 = smul.addr %s16, 2
          %s149 = smul.addr %s148, 64
          %s150 = scalar_lea.hbm %s1, %s149
          %s152 = sshll.u32 %s144, 4
          %s153 = int_to_ptr.vmem [resolvable:$true] %s152
          %155 = dma.hbm_to_vmem [thread:$0]  %s150, 128, %s153, %s141
        $region24: #{_noise_injection_full.1} parent=19 // pred_fallthru
          _
        // Predicated region
        $region25: #{_noise_injection_full.1} parent=19 // pred_check
          %p156 = pneg %p83
        $region26: #{_noise_injection_full.1} parent=19 // pred_check_branch
          %158 = sbr.rel (%p156) target = $region28
        $region27: #{_noise_injection_full.1} parent=19 // pred_region
          %p159 = scmp.lt.s32.totalorder %s16, 1
          %s160 = scalar_select %p159, %s16, 1
          %s161 = smul.addr %s160, 2
          %s162 = scalar_lea.vmem %s2, %s161
        $region28: #{_noise_injection_full.1} parent=19 // pred_fallthru
          _
      $region20: #{_noise_injection_full.1} parent=5 // pred_fallthru
        _
      %p163 = scmp.le.s32.totalorder 1, %s16
      %p164 = scmp.lt.s32.totalorder %s16, 3
      %p165 = pnand %p163, %p164
      %p166 = pneg %p165
      // Predicated region
      $region29: #{_noise_injection_full.1} parent=5 // pred_check
        _
      $region30: #{_noise_injection_full.1} parent=5 // pred_check_branch
        %168 = sbr.rel (%p165) target = $region32
      $region31: #{_noise_injection_full.1} parent=5 // pred_region
        %s169 = ssub.s32 %s16, 1
        %s170 = sand.u32 %s50, 1
        %s171 = scalar_lea.sflag [#allocation4], %s170
        %s172 = sand.u32 %s50, 1
        %s173 = smul.addr %s172, 8
        %s174 = scalar_lea.vmem [#allocation3], %s173
        // Predicated region
        $region33: #{_noise_injection_full.1} parent=31 // pred_check
          %p175 = pneg %p63
        $region34: #{_noise_injection_full.1} parent=31 // pred_check_branch
          %177 = sbr.rel (%p175) target = $region36
        $region35: #{_noise_injection_full.1} parent=31 // pred_region
          %178 = dma.done %s171, 128
        $region36: #{_noise_injection_full.1} parent=31 // pred_fallthru
          _
        %p179 = pneg %p37
        %p180 = pneg %p34
        %s181 = sand.u32 %s50, 1
        %s182 = scalar_lea.sflag [#allocation4], %s181
        %s183 = sand.u32 %s50, 1
        %s184 = smul.addr %s183, 8
        %s185 = scalar_lea.vmem [#allocation3], %s184
        %p186 = pneg %p63
        %p187 = pneg %p60
        %p188 = scmp.lt.s32.totalorder %s21, 1
        %s189 = scalar_select %p188, %s21, 1
        %s190 = smul.addr %s189, 2
        %s191 = scalar_lea.vmem %s2, %s190
        %p192 = pneg %p89
        %p193 = pneg %p86
        %p194 = pneg %p115
        %p195 = pneg %p112
        %s196 = sand.u32 %s102, 1
        %s197 = scalar_lea.sflag [#allocation5], %s196
        %s198 = sand.u32 %s102, 1
        %s199 = smul.addr %s198, 8
        %s200 = scalar_lea.vmem [#allocation6], %s199
        %p201 = scmp.lt.s32.totalorder %s21, 1
        %s202 = scalar_select %p201, %s21, 1
        %s203 = smul.addr %s202, 2
        %s204 = scalar_lea.vmem %s2, %s203
        %s205 = sld [smem:[#allocation2]]
        %v206 = vld [vmem:[%s204] sm:$0x3]
        %v207 = vstv %s205
        %v208 = vmul.f32 %v207, %v206
        %v209 = vld [vmem:[%s174] sm:$0xff]
        %v211 = vlaneseq
        %v212 = vshrl.u32 %v211, 7
        %v213 = vsub.s32 0, %v212
        %v214 = vrot.slane %v208, %v213
        %v215 = vlaneseq
        %v216 = vshrl.u32 %v215, 7
        %v217 = vsub.s32 1, %v216
        %v218 = vrot.slane %v208, %v217
        %v219 = vcombine.low %v214, %v218
        %v221 = vadd.f32 %v209, %v219
        %222 = vst [vmem:[%s200] sm:$0xff] %v221
        %s223 = sand.u32 %s102, 1
        %s224 = scalar_lea.sflag [#allocation5], %s223
        %s225 = sand.u32 %s102, 1
        %s226 = smul.addr %s225, 8
        %s227 = scalar_lea.vmem [#allocation6], %s226
        // Predicated region
        $region37: #{_noise_injection_full.1} parent=31 // pred_check
          %p228 = pneg %p112
        $region38: #{_noise_injection_full.1} parent=31 // pred_check_branch
          %230 = sbr.rel (%p228) target = $region40
        $region39: #{_noise_injection_full.1} parent=31 // pred_region
          %s232 = ssub.s32 128, 128
          %233 = vsyncadd %s224, %s232
          %s234 = smul.addr %s21, 2
          %s235 = smul.addr %s234, 64
          %s236 = scalar_lea.hbm %s3, %s235
          %s238 = sshll.u32 %s227, 4
          %s239 = int_to_ptr.vmem [resolvable:$true] %s238
          %241 = dma.vmem_to_hbm [thread:$0]  %s239, 128, %s236, %s224
        $region40: #{_noise_injection_full.1} parent=31 // pred_fallthru
          _
      $region32: #{_noise_injection_full.1} parent=5 // pred_fallthru
        _
      %p242 = scmp.le.s32.totalorder 2, %s16
      // Predicated region
      $region41: #{_noise_injection_full.1} parent=5 // pred_check
        %p243 = pneg %p242
      $region42: #{_noise_injection_full.1} parent=5 // pred_check_branch
        %245 = sbr.rel (%p243) target = $region44
      $region43: #{_noise_injection_full.1} parent=5 // pred_region
        %s246 = ssub.s32 %s16, 2
        // Predicated region
        $region45: #{_noise_injection_full.1} parent=43 // pred_check
          %p247 = pneg %p118
        $region46: #{_noise_injection_full.1} parent=43 // pred_check_branch
          %249 = sbr.rel (%p247) target = $region48
        $region47: #{_noise_injection_full.1} parent=43 // pred_region
          %s250 = sand.u32 %s103, 1
          %s251 = scalar_lea.sflag [#allocation5], %s250
          %s252 = sand.u32 %s103, 1
          %s253 = smul.addr %s252, 8
          %s254 = scalar_lea.vmem [#allocation6], %s253
          %255 = dma.done %s251, 128
        $region48: #{_noise_injection_full.1} parent=43 // pred_fallthru
          _
      $region44: #{_noise_injection_full.1} parent=5 // pred_fallthru
        _
    $region6: #{_noise_injection_full.1} parent=1 // loop_footer
      %s20 = sadd.s32 1, %s16
    $region7: #{_noise_injection_full.1} parent=1 // loop_footer_branch
      %15 = sbr.rel target = $region3
    $region8: #{_noise_injection_full.1} parent=1 // loop_exit
      _
    %256 = vsyncpa [#allocation4], 1
    %s257 = scalar_lea.sflag [#allocation4], 1
    %258 = vsyncpa %s257, 1
    %259 = vsyncpa [#allocation5], 1
    %s260 = scalar_lea.sflag [#allocation5], 1
    %261 = vsyncpa %s260, 1

</llo_original>
